<compile_context>
chip_gen: v7x
topology: tpu7x:2x2x1
jax: 0.10.0
libtpu: 0.0.40
codegen_flags: <defaults>
</compile_context>

<pallas_src>
import functools

import jax
import jax.numpy as jnp
import numpy as np
from jax import lax
from jax.experimental import pallas as pl
from jax.experimental.pallas import tpu as pltpu

BN_EPS = 1e-5
_ROW_BLOCK = 8                      # output rows per grid step (review: multi-row tiles)
_VMEM_LIMIT = 32 * 1024 * 1024      # row-blocked halos keep residency tiny on every gen


def _cparams(sem):
    return pltpu.CompilerParams(dimension_semantics=sem, vmem_limit_bytes=_VMEM_LIMIT)


def _block_rows(h, target=_ROW_BLOCK):
    """Largest divisor of h that is <= target (>= 1)."""
    bh = 1
    for d in range(1, min(h, target) + 1):
        if h % d == 0:
            bh = d
    return bh


def _pad_split_cols(x_nhcw, pt, pb, pleft, pright, s, ws_min):
    """Zero-pad spatially then column-parity-split: (N,H,C,W) -> (N,Hp,s,C,Ws).

    Single fused XLA producer (pad + strided slices + stack) so the activation is
    rewritten to HBM exactly once before a strided spatial conv.
    """
    x = jnp.pad(x_nhcw, ((0, 0), (pt, pb), (0, 0), (pleft, pright)))
    wp = x.shape[-1]
    ws = max(-(-wp // s), ws_min)
    extra = ws * s - wp
    if extra:
        x = jnp.pad(x, ((0, 0), (0, 0), (0, 0), (0, extra)))
    return jnp.stack([x[..., p::s] for p in range(s)], axis=2)


# --------------------------- Pallas kernels ---------------------------

def _conv1x1_kernel(x_ref, w_ref, b_ref, o_ref, *, bh):
    # Per-row 1x1 conv: (Cout, Cin) @ (Cin, W) + b, straight in (N, H, C, W) layout.
    w = w_ref[...]
    b = b_ref[...]
    for r in range(bh):
        o_ref[0, r] = jnp.dot(w, x_ref[0, r], preferred_element_type=jnp.float32) + b


def _bn_relu_kernel(z_ref, sc_ref, sh_ref, act_ref, *, bh):
    sc = sc_ref[...]
    sh = sh_ref[...]
    for r in range(bh):
        act_ref[0, r] = jnp.maximum(z_ref[0, r] * sc + sh, 0.0)


def _bn_relu_matmul_kernel(z_ref, sc_ref, sh_ref, w_ref, act_ref, core_ref, *, bh):
    # act  = relu(z * scale + shift)     (folded training-mode BN)
    # core = W_next @ act                (next branch's 1x1 reduction, fused)
    sc = sc_ref[...]
    sh = sh_ref[...]
    w = w_ref[...]
    for r in range(bh):
        a = jnp.maximum(z_ref[0, r] * sc + sh, 0.0)
        act_ref[0, r] = a
        core_ref[0, r] = jnp.dot(w, a, preferred_element_type=jnp.float32)


def _conv_kxk_stats_kernel(x_hbm, w_ref, b_ref, z_ref, s1_ref, s2_ref, xbuf, sem,
                           *, kh, kw, stride, bh, wo, rows_in, hin):
    """BH output rows of a VALID kh x kw strided conv + per-block BatchNorm partial stats.

    x_hbm : (N*Hin, s, Cin, Ws) column-parity-split padded activation, left in HBM;
            only the (rows_in, s, Cin, Ws) halo window of this row block is DMA'd.
    w_ref : (kh, Cout, kw*Cin) -- the kw taps of each kernel row packed along K.
    """
    n = pl.program_id(0)
    j = pl.program_id(1)
    start = n * hin + j * (bh * stride)
    cp = pltpu.make_async_copy(x_hbm.at[pl.ds(start, rows_in)], xbuf, sem)
    cp.start()
    cp.wait()

    w = w_ref[...]                       # (kh, Cout, kw*Cin)
    b = b_ref[...]                       # (Cout, 1)
    cout = w.shape[1]
    s1 = jnp.zeros((cout, 1), jnp.float32)
    s2 = jnp.zeros((cout, 1), jnp.float32)
    for r in range(bh):
        acc = jnp.zeros((cout, wo), jnp.float32)
        for dh in range(kh):
            planes = [xbuf[r * stride + dh, p] for p in range(stride)]   # (Cin, Ws) each
            taps = jnp.concatenate(
                [planes[dw % stride][:, dw // stride:dw // stride + wo]
                 for dw in range(kw)], axis=0)                           # (kw*Cin, Wo)
            acc = acc + jnp.dot(w[dh], taps, preferred_element_type=jnp.float32)
        zr = acc + b
        z_ref[0, r] = zr
        s1 = s1 + jnp.sum(zr, axis=1, keepdims=True)
        s2 = s2 + jnp.sum(zr * zr, axis=1, keepdims=True)
    # One store per row block; no cross-step accumulation -> row axis is "parallel".
    s1_ref[0, 0] = s1
    s2_ref[0, 0] = s2


def _maxpool_conv_kernel(x_hbm, w_ref, b_ref, o_ref, xbuf, sem,
                         *, stride, bh, wq, hp, wp, rows_in, hpad):
    """BH output rows of fused (stride subsample) -> 3x3 max -> 1x1 conv + bias."""
    n = pl.program_id(0)
    j = pl.program_id(1)
    start = n * hpad + j * (bh * stride)
    cp = pltpu.make_async_copy(x_hbm.at[pl.ds(start, rows_in)], xbuf, sem)
    cp.start()
    cp.wait()

    w = w_ref[...]
    b = b_ref[...]
    jj = lax.broadcasted_iota(jnp.int32, (1, wq), 1)
    col_ok = (jj >= 1) & (stride * jj <= wp)
    for r in range(bh):
        i = j * bh + r
        mx = None
        for dh in range(3):
            planes = [xbuf[r * stride + dh, p] for p in range(stride)]
            for dw in range(3):
                tap = planes[dw % stride][:, dw // stride:dw // stride + wq]
                mx = tap if mx is None else jnp.maximum(mx, tap)
        ok = col_ok & (i >= 1) & (stride * i <= hp)
        v = jnp.where(ok, mx, 0.0)   # zero ring = the strided 1x1 conv's padding
        o_ref[0, r] = jnp.dot(w, v, preferred_element_type=jnp.float32) + b


# --------------------------- Pallas wrappers ---------------------------

def conv1x1_rowwise(x_nhcw, w, b):
    n, h, cin, wpix = x_nhcw.shape
    cout = w.shape[0]
    bh = _block_rows(h)
    return pl.pallas_call(
        functools.partial(_conv1x1_kernel, bh=bh),
        out_shape=jax.ShapeDtypeStruct((n, h, cout, wpix), jnp.float32),
        grid=(n, h // bh),
        in_specs=[pl.BlockSpec((1, bh, cin, wpix), lambda nn, jj: (nn, jj, 0, 0)),
                  pl.BlockSpec((cout, cin), lambda nn, jj: (0, 0)),
                  pl.BlockSpec((cout, 1), lambda nn, jj: (0, 0))],
        out_specs=pl.BlockSpec((1, bh, cout, wpix), lambda nn, jj: (nn, jj, 0, 0)),
        compiler_params=_cparams(("parallel", "parallel")),
    )(x_nhcw, w, b.reshape(cout, 1))


def bn_relu(z_nhcw, scale, shift):
    n, h, c, wpix = z_nhcw.shape
    bh = _block_rows(h)
    return pl.pallas_call(
        functools.partial(_bn_relu_kernel, bh=bh),
        out_shape=jax.ShapeDtypeStruct((n, h, c, wpix), jnp.float32),
        grid=(n, h // bh),
        in_specs=[pl.BlockSpec((1, bh, c, wpix), lambda nn, jj: (nn, jj, 0, 0)),
                  pl.BlockSpec((c, 1), lambda nn, jj: (0, 0)),
                  pl.BlockSpec((c, 1), lambda nn, jj: (0, 0))],
        out_specs=pl.BlockSpec((1, bh, c, wpix), lambda nn, jj: (nn, jj, 0, 0)),
        compiler_params=_cparams(("parallel", "parallel")),
    )(z_nhcw, scale, shift)


def bn_relu_matmul(z_nhcw, scale, shift, w_next):
    n, h, c1, wpix = z_nhcw.shape
    c2 = w_next.shape[0]
    bh = _block_rows(h)
    return pl.pallas_call(
        functools.partial(_bn_relu_matmul_kernel, bh=bh),
        out_shape=(jax.ShapeDtypeStruct((n, h, c1, wpix), jnp.float32),
                   jax.ShapeDtypeStruct((n, h, c2, wpix), jnp.float32)),
        grid=(n, h // bh),
        in_specs=[pl.BlockSpec((1, bh, c1, wpix), lambda nn, jj: (nn, jj, 0, 0)),
                  pl.BlockSpec((c1, 1), lambda nn, jj: (0, 0)),
                  pl.BlockSpec((c1, 1), lambda nn, jj: (0, 0)),
                  pl.BlockSpec((c2, c1), lambda nn, jj: (0, 0))],
        out_specs=(pl.BlockSpec((1, bh, c1, wpix), lambda nn, jj: (nn, jj, 0, 0)),
                   pl.BlockSpec((1, bh, c2, wpix), lambda nn, jj: (nn, jj, 0, 0))),
        compiler_params=_cparams(("parallel", "parallel")),
    )(z_nhcw, scale, shift, w_next)


def conv_kxk_with_stats(x_nhcw, w_oihw, b, stride, pad):
    """Strided kh x kw conv with `pad` zero padding on (N,H,C,W) input.

    Returns pre-BN output z (N,Ho,Cout,Wo) plus per-(image,row-block) BN partial sums.
    """
    n, h, c, wpix = x_nhcw.shape
    cout, cin_w, kh, kw = w_oihw.shape
    assert cin_w == c
    hin, win = h + 2 * pad, wpix + 2 * pad
    ho = (hin - kh) // stride + 1
    wo = (win - kw) // stride + 1
    ws_min = wo + (kw - 1) // stride
    planes = _pad_split_cols(x_nhcw, pad, pad, pad, pad, stride, ws_min)
    ws = planes.shape[-1]
    planes = planes.reshape(n * hin, stride, c, ws)        # flat leading dim for the DMA
    bh = _block_rows(ho)
    nj = ho // bh
    rows_in = (bh - 1) * stride + kh
    # Pack the kw taps of each kernel row along the contraction axis (K = kw*Cin).
    w_taps = jnp.transpose(w_oihw, (2, 0, 3, 1)).reshape(kh, cout, kw * c)
    kern = functools.partial(_conv_kxk_stats_kernel, kh=kh, kw=kw, stride=stride,
                             bh=bh, wo=wo, rows_in=rows_in, hin=hin)
    z, s1, s2 = pl.pallas_call(
        kern,
        out_shape=(jax.ShapeDtypeStruct((n, ho, cout, wo), jnp.float32),
                   jax.ShapeDtypeStruct((n, nj, cout, 1), jnp.float32),
                   jax.ShapeDtypeStruct((n, nj, cout, 1), jnp.float32)),
        grid=(n, nj),
        in_specs=[pl.BlockSpec(memory_space=pl.ANY),       # stays in HBM; halo DMA in-kernel
                  pl.BlockSpec((kh, cout, kw * c), lambda nn, jj: (0, 0, 0)),
                  pl.BlockSpec((cout, 1), lambda nn, jj: (0, 0))],
        out_specs=(pl.BlockSpec((1, bh, cout, wo), lambda nn, jj: (nn, jj, 0, 0)),
                   pl.BlockSpec((1, 1, cout, 1), lambda nn, jj: (nn, jj, 0, 0)),
                   pl.BlockSpec((1, 1, cout, 1), lambda nn, jj: (nn, jj, 0, 0))),
        scratch_shapes=[pltpu.VMEM((rows_in, stride, c, ws), jnp.float32),
                        pltpu.SemaphoreType.DMA(())],
        compiler_params=_cparams(("parallel", "parallel")),
    )(planes, w_taps, b.reshape(cout, 1))
    return z, s1, s2, ho, wo


def maxpool_conv(out5_nhcw, w, b, stride):
    """MaxPool2d(3,1) + Conv2d(1x1, stride, pad=1) fused; subsample commuted before max."""
    n, h5, c2, w5 = out5_nhcw.shape
    c3 = w.shape[0]
    hp, wp = h5 - 2, w5 - 2                        # pooled (VALID 3x3, stride 1) extent
    hq = (hp + 2 - 1) // stride + 1                # Conv2d(1x1, stride, padding=1)
    wq = (wp + 2 - 1) // stride + 1
    need_h = stride * (hq - 1) + 3                 # deepest padded row/col touched in-kernel
    need_w = stride * (wq - 1) + 3
    ws_min = wq + (3 - 1) // stride
    planes = _pad_split_cols(out5_nhcw, 1, max(0, need_h - h5 - 1),
                             1, max(0, need_w - w5 - 1), stride, ws_min)
    hpad, ws = planes.shape[1], planes.shape[-1]
    planes = planes.reshape(n * hpad, stride, c2, ws)
    bh = _block_rows(hq)
    nj = hq // bh
    rows_in = (bh - 1) * stride + 3
    kern = functools.partial(_maxpool_conv_kernel, stride=stride, bh=bh, wq=wq,
                             hp=hp, wp=wp, rows_in=rows_in, hpad=hpad)
    return pl.pallas_call(
        kern,
        out_shape=jax.ShapeDtypeStruct((n, hq, c3, wq), jnp.float32),
        grid=(n, nj),
        in_specs=[pl.BlockSpec(memory_space=pl.ANY),
                  pl.BlockSpec((c3, c2), lambda nn, jj: (0, 0)),
                  pl.BlockSpec((c3, 1), lambda nn, jj: (0, 0))],
        out_specs=pl.BlockSpec((1, bh, c3, wq), lambda nn, jj: (nn, jj, 0, 0)),
        scratch_shapes=[pltpu.VMEM((rows_in, stride, c2, ws), jnp.float32),
                        pltpu.SemaphoreType.DMA(())],
        compiler_params=_cparams(("parallel", "parallel")),
    )(planes, w, b.reshape(c3, 1))


# --------------------------- BN glue ---------------------------

def _bn_affine(s1, s2, count, gamma, beta):
    """Fold training-mode BatchNorm (batch stats, biased var) into scale/shift vectors."""
    tot1 = jnp.sum(s1, axis=(0, 1))[:, 0]
    tot2 = jnp.sum(s2, axis=(0, 1))[:, 0]
    mean = tot1 / count
    var = tot2 / count - mean * mean
    scale = gamma * lax.rsqrt(var + BN_EPS)
    shift = beta - mean * scale
    return scale.reshape(-1, 1), shift.reshape(-1, 1)


# --------------------------- forward ---------------------------

def inception_forward(x_nchw, params, stride=2):
    n, cin, h, w = x_nchw.shape
    c1 = params["w3_1"].shape[0]
    c2 = params["w5_1"].shape[0]
    c3 = params["wmp"].shape[0]

    # Everything runs in (N, H, C, W) layout: C on sublanes, W on lanes.  The only XLA
    # relayouts left are this input transpose and the final NCHW output transposes.
    x_nhcw = jnp.transpose(x_nchw, (0, 2, 1, 3))

    # ---- conv3 branch: Conv1x1(s=1) -> Conv3x3(s=stride, p=1) -> bn1 -> relu ----
    y1 = conv1x1_rowwise(x_nhcw, params["w3_1"].reshape(c1, cin), params["b3_1"])
    z3, s1a, s2a, h3, w3 = conv_kxk_with_stats(y1, params["w3_2"], params["b3_2"],
                                               stride, pad=1)
    scale3, shift3 = _bn_affine(s1a, s2a, n * h3 * w3, params["bn1_g"], params["bn1_b"])
    # bn1 + relu fused with conv5's 1x1 reduction (out3 read from HBM once).
    out3, core5 = bn_relu_matmul(z3, scale3, shift3, params["w5_1"].reshape(c2, c1))

    # ---- conv5 branch: Conv1x1(s=1, p=1) -> Conv5x5(s=stride, p=1) -> bn2 -> relu ----
    # The 1x1's padding ring equals its bias; the 5x5's padding adds an outer zero ring.
    # Build both with one pad-of-2 plus a static inner-ring bias mask (merged pads).
    ring = np.zeros((1, h3 + 4, 1, w3 + 4), np.float32)
    ring[:, 1:h3 + 3, :, 1:w3 + 3] = 1.0
    y5q = (jnp.pad(core5, ((0, 0), (2, 2), (0, 0), (2, 2)))
           + params["b5_1"].reshape(1, 1, c2, 1) * jnp.asarray(ring))
    z5, s1b, s2b, h5, w5 = conv_kxk_with_stats(y5q, params["w5_2"], params["b5_2"],
                                               stride, pad=0)
    scale5, shift5 = _bn_affine(s1b, s2b, n * h5 * w5, params["bn2_g"], params["bn2_b"])
    out5 = bn_relu(z5, scale5, shift5)

    # ---- maxpoolConv branch: MaxPool2d(3,1) -> Conv1x1(stride, p=1), fused ----
    pool = maxpool_conv(out5, params["wmp"].reshape(c3, c2), params["bmp"], stride)

    to_nchw = lambda a: jnp.transpose(a, (0, 2, 1, 3))
    return [to_nchw(out3), to_nchw(out5), to_nchw(pool)]


# --------------------------- params & reference ---------------------------

def init_params(key, in_channel, out_channel):
    c1, c2, c3 = out_channel[1], out_channel[2], out_channel[3]
    ks = jax.random.split(key, 12)

    def rnd(k, shape, scale=0.1):
        return scale * jax.random.normal(k, shape, jnp.float32)

    return {
        "w3_1": rnd(ks[0], (c1, in_channel, 1, 1)), "b3_1": rnd(ks[1], (c1,)),
        "w3_2": rnd(ks[2], (c1, c1, 3, 3)),         "b3_2": rnd(ks[3], (c1,)),
        "w5_1": rnd(ks[4], (c2, c1, 1, 1)),         "b5_1": rnd(ks[5], (c2,)),
        "w5_2": rnd(ks[6], (c2, c2, 5, 5)),         "b5_2": rnd(ks[7], (c2,)),
        "wmp":  rnd(ks[8], (c3, c2, 1, 1)),         "bmp":  rnd(ks[9], (c3,)),
        "bn1_g": 1.0 + rnd(ks[10], (c1,)), "bn1_b": 0.5 * rnd(ks[10], (c1,)),
        "bn2_g": 1.0 + rnd(ks[11], (c2,)), "bn2_b": 0.5 * rnd(ks[11], (c2,)),
    }


def reference_forward(x_nchw, params, stride=2):
    """Pure-XLA reference used only for an in-script sanity check."""
    x = jnp.transpose(x_nchw, (0, 2, 3, 1))
    dn = ("NHWC", "OIHW", "NHWC")

    def conv(a, w, b, s, p):
        y = lax.conv_general_dilated(a, w, (s, s), ((p, p), (p, p)),
                                     dimension_numbers=dn,
                                     precision=lax.Precision.HIGHEST)
        return y + b.reshape(1, 1, 1, -1)

    def bn_relu_ref(a, g, b):
        mean = jnp.mean(a, axis=(0, 1, 2), keepdims=True)
        var = jnp.mean((a - mean) ** 2, axis=(0, 1, 2), keepdims=True)
        y = (a - mean) / jnp.sqrt(var + BN_EPS) * g.reshape(1, 1, 1, -1) + b.reshape(1, 1, 1, -1)
        return jnp.maximum(y, 0.0)

    out3 = conv(x, params["w3_1"], params["b3_1"], 1, 0)
    out3 = conv(out3, params["w3_2"], params["b3_2"], stride, 1)
    out3 = bn_relu_ref(out3, params["bn1_g"], params["bn1_b"])

    out5 = conv(out3, params["w5_1"], params["b5_1"], 1, 1)
    out5 = conv(out5, params["w5_2"], params["b5_2"], stride, 1)
    out5 = bn_relu_ref(out5, params["bn2_g"], params["bn2_b"])

    pooled = lax.reduce_window(out5, -jnp.inf, lax.max, (1, 3, 3, 1), (1, 1, 1, 1), "VALID")
    pool = conv(pooled, params["wmp"], params["bmp"], stride, 1)

    to_nchw = lambda a: jnp.transpose(a, (0, 3, 1, 2))
    return [to_nchw(out3), to_nchw(out5), to_nchw(pool)]


# --------------------------- main ---------------------------

if __name__ == "__main__":
    key = jax.random.PRNGKey(0)
    k_x, k_p = jax.random.split(key)

    N, Cin, H, W = 2, 4, 16, 16
    out_channel = [0, 8, 16, 8]   # out_channel[0] is unused by the module
    stride = 2

    x = jax.random.normal(k_x, (N, Cin, H, W), jnp.float32)
    params = init_params(k_p, Cin, out_channel)

    outs = inception_forward(x, params, stride=stride)
    outs = jax.block_until_ready(outs)

    refs = reference_forward(x, params, stride=stride)
    for o, r in zip(outs, refs):
        assert o.shape == r.shape and o.dtype == r.dtype
        np.testing.assert_allclose(np.asarray(o), np.asarray(r), rtol=1e-2, atol=1e-2)

    print("KERNEL_OK")
</pallas_src>

<mosaic_0001>
module attributes {stable_mosaic.version = 11 : i64} {
  func.func @_conv1x1_kernel(%arg0: i32, %arg1: i32, %arg2: memref<1x8x4x16xf32, #tpu.memory_space<vmem>>, %arg3: memref<8x4xf32, #tpu.memory_space<vmem>>, %arg4: memref<8x1xf32, #tpu.memory_space<vmem>>, %arg5: memref<1x8x8x16xf32, #tpu.memory_space<vmem>>) attributes {dimension_semantics = [#tpu.dimension_semantics<parallel>, #tpu.dimension_semantics<parallel>], iteration_bounds = array<i64: 2, 2>, scalar_prefetch = 0 : i64, scratch_operands = 0 : i64, tpu.core_type = #tpu.core_type<tc>, window_params = [{transform_indices = @transform_0, window_bounds = array<i64: 1, 8, 4, 16>}, {pipeline_mode = #tpu.pipeline_mode<synchronous>, transform_indices = @transform_1, window_bounds = array<i64: 8, 4>}, {pipeline_mode = #tpu.pipeline_mode<synchronous>, transform_indices = @transform_2, window_bounds = array<i64: 8, 1>}, {transform_indices = @transform_3, window_bounds = array<i64: 1, 8, 8, 16>}]} {
    %c0 = arith.constant 0 : index
    %c0_0 = arith.constant 0 : index
    %0 = vector.load %arg3[%c0, %c0_0] : memref<8x4xf32, #tpu.memory_space<vmem>>, vector<8x4xf32>
    %c0_1 = arith.constant 0 : index
    %c0_2 = arith.constant 0 : index
    %1 = vector.load %arg4[%c0_1, %c0_2] : memref<8x1xf32, #tpu.memory_space<vmem>>, vector<8x1xf32>
    %c0_3 = arith.constant 0 : index
    %c0_4 = arith.constant 0 : index
    %c0_5 = arith.constant 0 : index
    %c0_6 = arith.constant 0 : index
    %2 = vector.load %arg2[%c0_3, %c0_4, %c0_5, %c0_6] : memref<1x8x4x16xf32, #tpu.memory_space<vmem>>, vector<1x1x4x16xf32>
    %3 = vector.shape_cast %2 : vector<1x1x4x16xf32> to vector<4x16xf32>
    %cst = arith.constant dense<0.000000e+00> : vector<8x16xf32>
    %4 = tpu.matmul %0, %3, %cst {dimension_numbers = #tpu.dot_dimension_numbers<[1], [0], [0], [1], [0, 0, 1, 1], [], []>} : vector<8x4xf32>, vector<4x16xf32>, vector<8x16xf32> -> vector<8x16xf32>
    %5 = vector.broadcast %1 : vector<8x1xf32> to vector<8x16xf32>
    %6 = arith.addf %4, %5 : vector<8x16xf32>
    %c0_7 = arith.constant 0 : index
    %c0_8 = arith.constant 0 : index
    %c0_9 = arith.constant 0 : index
    %c0_10 = arith.constant 0 : index
    %7 = vector.load %arg5[%c0_7, %c0_8, %c0_9, %c0_10] : memref<1x8x8x16xf32, #tpu.memory_space<vmem>>, vector<1x1x8x16xf32>
    %8 = vector.shape_cast %7 : vector<1x1x8x16xf32> to vector<8x16xf32>
    %9 = vector.shape_cast %6 : vector<8x16xf32> to vector<1x1x8x16xf32>
    tpu.vector_store %arg5[%c0_7, %c0_8, %c0_9, %c0_10], %9 {strides = array<i32>} : memref<1x8x8x16xf32, #tpu.memory_space<vmem>>, vector<1x1x8x16xf32>,
    %c0_11 = arith.constant 0 : index
    %c1 = arith.constant 1 : index
    %c0_12 = arith.constant 0 : index
    %c0_13 = arith.constant 0 : index
    %10 = vector.load %arg2[%c0_11, %c1, %c0_12, %c0_13] : memref<1x8x4x16xf32, #tpu.memory_space<vmem>>, vector<1x1x4x16xf32>
    %11 = vector.shape_cast %10 : vector<1x1x4x16xf32> to vector<4x16xf32>
    %cst_14 = arith.constant dense<0.000000e+00> : vector<8x16xf32>
    %12 = tpu.matmul %0, %11, %cst_14 {dimension_numbers = #tpu.dot_dimension_numbers<[1], [0], [0], [1], [0, 0, 1, 1], [], []>} : vector<8x4xf32>, vector<4x16xf32>, vector<8x16xf32> -> vector<8x16xf32>
    %13 = vector.broadcast %1 : vector<8x1xf32> to vector<8x16xf32>
    %14 = arith.addf %12, %13 : vector<8x16xf32>
    %c0_15 = arith.constant 0 : index
    %c1_16 = arith.constant 1 : index
    %c0_17 = arith.constant 0 : index
    %c0_18 = arith.constant 0 : index
    %15 = vector.load %arg5[%c0_15, %c1_16, %c0_17, %c0_18] : memref<1x8x8x16xf32, #tpu.memory_space<vmem>>, vector<1x1x8x16xf32>
    %16 = vector.shape_cast %15 : vector<1x1x8x16xf32> to vector<8x16xf32>
    %17 = vector.shape_cast %14 : vector<8x16xf32> to vector<1x1x8x16xf32>
    tpu.vector_store %arg5[%c0_15, %c1_16, %c0_17, %c0_18], %17 {strides = array<i32>} : memref<1x8x8x16xf32, #tpu.memory_space<vmem>>, vector<1x1x8x16xf32>,
    %c0_19 = arith.constant 0 : index
    %c2 = arith.constant 2 : index
    %c0_20 = arith.constant 0 : index
    %c0_21 = arith.constant 0 : index
    %18 = vector.load %arg2[%c0_19, %c2, %c0_20, %c0_21] : memref<1x8x4x16xf32, #tpu.memory_space<vmem>>, vector<1x1x4x16xf32>
    %19 = vector.shape_cast %18 : vector<1x1x4x16xf32> to vector<4x16xf32>
    %cst_22 = arith.constant dense<0.000000e+00> : vector<8x16xf32>
    %20 = tpu.matmul %0, %19, %cst_22 {dimension_numbers = #tpu.dot_dimension_numbers<[1], [0], [0], [1], [0, 0, 1, 1], [], []>} : vector<8x4xf32>, vector<4x16xf32>, vector<8x16xf32> -> vector<8x16xf32>
    %21 = vector.broadcast %1 : vector<8x1xf32> to vector<8x16xf32>
    %22 = arith.addf %20, %21 : vector<8x16xf32>
    %c0_23 = arith.constant 0 : index
    %c2_24 = arith.constant 2 : index
    %c0_25 = arith.constant 0 : index
    %c0_26 = arith.constant 0 : index
    %23 = vector.load %arg5[%c0_23, %c2_24, %c0_25, %c0_26] : memref<1x8x8x16xf32, #tpu.memory_space<vmem>>, vector<1x1x8x16xf32>
    %24 = vector.shape_cast %23 : vector<1x1x8x16xf32> to vector<8x16xf32>
    %25 = vector.shape_cast %22 : vector<8x16xf32> to vector<1x1x8x16xf32>
    tpu.vector_store %arg5[%c0_23, %c2_24, %c0_25, %c0_26], %25 {strides = array<i32>} : memref<1x8x8x16xf32, #tpu.memory_space<vmem>>, vector<1x1x8x16xf32>,
    %c0_27 = arith.constant 0 : index
    %c3 = arith.constant 3 : index
    %c0_28 = arith.constant 0 : index
    %c0_29 = arith.constant 0 : index
    %26 = vector.load %arg2[%c0_27, %c3, %c0_28, %c0_29] : memref<1x8x4x16xf32, #tpu.memory_space<vmem>>, vector<1x1x4x16xf32>
    %27 = vector.shape_cast %26 : vector<1x1x4x16xf32> to vector<4x16xf32>
    %cst_30 = arith.constant dense<0.000000e+00> : vector<8x16xf32>
    %28 = tpu.matmul %0, %27, %cst_30 {dimension_numbers = #tpu.dot_dimension_numbers<[1], [0], [0], [1], [0, 0, 1, 1], [], []>} : vector<8x4xf32>, vector<4x16xf32>, vector<8x16xf32> -> vector<8x16xf32>
    %29 = vector.broadcast %1 : vector<8x1xf32> to vector<8x16xf32>
    %30 = arith.addf %28, %29 : vector<8x16xf32>
    %c0_31 = arith.constant 0 : index
    %c3_32 = arith.constant 3 : index
    %c0_33 = arith.constant 0 : index
    %c0_34 = arith.constant 0 : index
    %31 = vector.load %arg5[%c0_31, %c3_32, %c0_33, %c0_34] : memref<1x8x8x16xf32, #tpu.memory_space<vmem>>, vector<1x1x8x16xf32>
    %32 = vector.shape_cast %31 : vector<1x1x8x16xf32> to vector<8x16xf32>
    %33 = vector.shape_cast %30 : vector<8x16xf32> to vector<1x1x8x16xf32>
    tpu.vector_store %arg5[%c0_31, %c3_32, %c0_33, %c0_34], %33 {strides = array<i32>} : memref<1x8x8x16xf32, #tpu.memory_space<vmem>>, vector<1x1x8x16xf32>,
    %c0_35 = arith.constant 0 : index
    %c4 = arith.constant 4 : index
    %c0_36 = arith.constant 0 : index
    %c0_37 = arith.constant 0 : index
    %34 = vector.load %arg2[%c0_35, %c4, %c0_36, %c0_37] : memref<1x8x4x16xf32, #tpu.memory_space<vmem>>, vector<1x1x4x16xf32>
    %35 = vector.shape_cast %34 : vector<1x1x4x16xf32> to vector<4x16xf32>
    %cst_38 = arith.constant dense<0.000000e+00> : vector<8x16xf32>
    %36 = tpu.matmul %0, %35, %cst_38 {dimension_numbers = #tpu.dot_dimension_numbers<[1], [0], [0], [1], [0, 0, 1, 1], [], []>} : vector<8x4xf32>, vector<4x16xf32>, vector<8x16xf32> -> vector<8x16xf32>
    %37 = vector.broadcast %1 : vector<8x1xf32> to vector<8x16xf32>
    %38 = arith.addf %36, %37 : vector<8x16xf32>
    %c0_39 = arith.constant 0 : index
    %c4_40 = arith.constant 4 : index
    %c0_41 = arith.constant 0 : index
    %c0_42 = arith.constant 0 : index
    %39 = vector.load %arg5[%c0_39, %c4_40, %c0_41, %c0_42] : memref<1x8x8x16xf32, #tpu.memory_space<vmem>>, vector<1x1x8x16xf32>
    %40 = vector.shape_cast %39 : vector<1x1x8x16xf32> to vector<8x16xf32>
    %41 = vector.shape_cast %38 : vector<8x16xf32> to vector<1x1x8x16xf32>
    tpu.vector_store %arg5[%c0_39, %c4_40, %c0_41, %c0_42], %41 {strides = array<i32>} : memref<1x8x8x16xf32, #tpu.memory_space<vmem>>, vector<1x1x8x16xf32>,
    %c0_43 = arith.constant 0 : index
    %c5 = arith.constant 5 : index
    %c0_44 = arith.constant 0 : index
    %c0_45 = arith.constant 0 : index
    %42 = vector.load %arg2[%c0_43, %c5, %c0_44, %c0_45] : memref<1x8x4x16xf32, #tpu.memory_space<vmem>>, vector<1x1x4x16xf32>
    %43 = vector.shape_cast %42 : vector<1x1x4x16xf32> to vector<4x16xf32>
    %cst_46 = arith.constant dense<0.000000e+00> : vector<8x16xf32>
    %44 = tpu.matmul %0, %43, %cst_46 {dimension_numbers = #tpu.dot_dimension_numbers<[1], [0], [0], [1], [0, 0, 1, 1], [], []>} : vector<8x4xf32>, vector<4x16xf32>, vector<8x16xf32> -> vector<8x16xf32>
    %45 = vector.broadcast %1 : vector<8x1xf32> to vector<8x16xf32>
    %46 = arith.addf %44, %45 : vector<8x16xf32>
    %c0_47 = arith.constant 0 : index
    %c5_48 = arith.constant 5 : index
    %c0_49 = arith.constant 0 : index
    %c0_50 = arith.constant 0 : index
    %47 = vector.load %arg5[%c0_47, %c5_48, %c0_49, %c0_50] : memref<1x8x8x16xf32, #tpu.memory_space<vmem>>, vector<1x1x8x16xf32>
    %48 = vector.shape_cast %47 : vector<1x1x8x16xf32> to vector<8x16xf32>
    %49 = vector.shape_cast %46 : vector<8x16xf32> to vector<1x1x8x16xf32>
    tpu.vector_store %arg5[%c0_47, %c5_48, %c0_49, %c0_50], %49 {strides = array<i32>} : memref<1x8x8x16xf32, #tpu.memory_space<vmem>>, vector<1x1x8x16xf32>,
    %c0_51 = arith.constant 0 : index
    %c6 = arith.constant 6 : index
    %c0_52 = arith.constant 0 : index
    %c0_53 = arith.constant 0 : index
    %50 = vector.load %arg2[%c0_51, %c6, %c0_52, %c0_53] : memref<1x8x4x16xf32, #tpu.memory_space<vmem>>, vector<1x1x4x16xf32>
    %51 = vector.shape_cast %50 : vector<1x1x4x16xf32> to vector<4x16xf32>
    %cst_54 = arith.constant dense<0.000000e+00> : vector<8x16xf32>
    %52 = tpu.matmul %0, %51, %cst_54 {dimension_numbers = #tpu.dot_dimension_numbers<[1], [0], [0], [1], [0, 0, 1, 1], [], []>} : vector<8x4xf32>, vector<4x16xf32>, vector<8x16xf32> -> vector<8x16xf32>
    %53 = vector.broadcast %1 : vector<8x1xf32> to vector<8x16xf32>
    %54 = arith.addf %52, %53 : vector<8x16xf32>
    %c0_55 = arith.constant 0 : index
    %c6_56 = arith.constant 6 : index
    %c0_57 = arith.constant 0 : index
    %c0_58 = arith.constant 0 : index
    %55 = vector.load %arg5[%c0_55, %c6_56, %c0_57, %c0_58] : memref<1x8x8x16xf32, #tpu.memory_space<vmem>>, vector<1x1x8x16xf32>
    %56 = vector.shape_cast %55 : vector<1x1x8x16xf32> to vector<8x16xf32>
    %57 = vector.shape_cast %54 : vector<8x16xf32> to vector<1x1x8x16xf32>
    tpu.vector_store %arg5[%c0_55, %c6_56, %c0_57, %c0_58], %57 {strides = array<i32>} : memref<1x8x8x16xf32, #tpu.memory_space<vmem>>, vector<1x1x8x16xf32>,
    %c0_59 = arith.constant 0 : index
    %c7 = arith.constant 7 : index
    %c0_60 = arith.constant 0 : index
    %c0_61 = arith.constant 0 : index
    %58 = vector.load %arg2[%c0_59, %c7, %c0_60, %c0_61] : memref<1x8x4x16xf32, #tpu.memory_space<vmem>>, vector<1x1x4x16xf32>
    %59 = vector.shape_cast %58 : vector<1x1x4x16xf32> to vector<4x16xf32>
    %cst_62 = arith.constant dense<0.000000e+00> : vector<8x16xf32>
    %60 = tpu.matmul %0, %59, %cst_62 {dimension_numbers = #tpu.dot_dimension_numbers<[1], [0], [0], [1], [0, 0, 1, 1], [], []>} : vector<8x4xf32>, vector<4x16xf32>, vector<8x16xf32> -> vector<8x16xf32>
    %61 = vector.broadcast %1 : vector<8x1xf32> to vector<8x16xf32>
    %62 = arith.addf %60, %61 : vector<8x16xf32>
    %c0_63 = arith.constant 0 : index
    %c7_64 = arith.constant 7 : index
    %c0_65 = arith.constant 0 : index
    %c0_66 = arith.constant 0 : index
    %63 = vector.load %arg5[%c0_63, %c7_64, %c0_65, %c0_66] : memref<1x8x8x16xf32, #tpu.memory_space<vmem>>, vector<1x1x8x16xf32>
    %64 = vector.shape_cast %63 : vector<1x1x8x16xf32> to vector<8x16xf32>
    %65 = vector.shape_cast %62 : vector<8x16xf32> to vector<1x1x8x16xf32>
    tpu.vector_store %arg5[%c0_63, %c7_64, %c0_65, %c0_66], %65 {strides = array<i32>} : memref<1x8x8x16xf32, #tpu.memory_space<vmem>>, vector<1x1x8x16xf32>,
    return
  }
  func.func @transform_0(%arg0: i32, %arg1: i32) -> (i32, i32, i32, i32) {
    %c0_i32 = arith.constant 0 : i32
    %c0_i32_0 = arith.constant 0 : i32
    %c0_i32_1 = arith.constant 0 : i32
    return %arg0, %arg1, %c0_i32, %c0_i32_0 : i32, i32, i32, i32
  }
  func.func @transform_1(%arg0: i32, %arg1: i32) -> (i32, i32) {
    %c0_i32 = arith.constant 0 : i32
    %c0_i32_0 = arith.constant 0 : i32
    %c0_i32_1 = arith.constant 0 : i32
    return %c0_i32, %c0_i32_0 : i32, i32
  }
  func.func @transform_2(%arg0: i32, %arg1: i32) -> (i32, i32) {
    %c0_i32 = arith.constant 0 : i32
    %c0_i32_0 = arith.constant 0 : i32
    %c0_i32_1 = arith.constant 0 : i32
    return %c0_i32, %c0_i32_0 : i32, i32
  }
  func.func @transform_3(%arg0: i32, %arg1: i32) -> (i32, i32, i32, i32) {
    %c0_i32 = arith.constant 0 : i32
    %c0_i32_0 = arith.constant 0 : i32
    %c0_i32_1 = arith.constant 0 : i32
    return %arg0, %arg1, %c0_i32, %c0_i32_0 : i32, i32, i32, i32
  }
}

</mosaic_0001>

<llo_original>
// kernel: tpu_custom_call.1
$region0: #{tpu_custom_call.1}
  #allocation0 [shape = 'u32[]', space=smem, size = 0x4, offset = 0x4, fixed_abs, tag = 'smem constant byte address 0x4 - core index']
  #allocation1 [shape = 'u32[144,128]{1,0:T(1,128)}', space=vmem, size = 0x12000, scoped, tag = 'internal scratch']
  %s0 = inlined_call_operand.hbm [shape: f32[2,16,4,16], index: 0, kind: input, shape index: {}]
  %s1 = inlined_call_operand.vmem [shape: f32[8,4], index: 1, kind: input, shape index: {}]
  %s2 = inlined_call_operand.vmem [shape: f32[8,1], index: 2, kind: input, shape index: {}]
  %s3 = inlined_call_operand.hbm [shape: f32[2,16,8,16], index: 3, kind: output, shape index: {}]
  %s4 = sld [smem:[#allocation0]]
  $region49: #{tpu_custom_call.1} parent=0
    _
  %s6 = ssub.s32 1, %s4
  %s7 = scalar_select 0, %s6, %s4
  $region1: #{tpu_custom_call.1} parent=0
    #allocation2 [shape = 'u8[32768]{0}', space=vmem, size = 0x8000, scoped, tag = 'input window, operand 0']
    #allocation3 [shape = 's32[2]{0}', space=sflag, size = 0x8, scoped, tag = 'scoped memory for tpu_custom_call.1']
    #allocation4 [shape = 's32[2]{0}', space=sflag, size = 0x8, scoped, tag = 'scoped memory for tpu_custom_call.1']
    #allocation5 [shape = 'u8[65536]{0}', space=vmem, size = 0x10000, scoped, tag = 'output window, operand 0']
    %8 = vsyncpa [#allocation3], 0
    %s9 = scalar_lea.sflag [#allocation3], 1
    %10 = vsyncpa %s9, 0
    %11 = vsyncpa [#allocation4], 0
    %s12 = scalar_lea.sflag [#allocation4], 1
    %13 = vsyncpa %s12, 0
    loop: start=0, step=1, limit=6
    $region2: #{tpu_custom_call.1} parent=1 // loop_pre_header
      _
    $region3: #{tpu_custom_call.1} parent=1 // loop_header
      %s15 = sphi 0, %s19
      %p16 = scmp.ge.s32.totalorder %s15, 6
      %s22 = sphi 0, %s34
      %s23 = sphi 0, %s30
      %s24 = sphi 0, %s22
      %s25 = sphi 0, %s23
      %s26 = sphi 0, %s24
      %s27 = sphi 0, %s25
      %s39 = sphi 0, %s41
      %s42 = sphi 0, %s39
      %s43 = sphi 0, %s42
      %s59 = sphi 0, %s43
      %s63 = sphi 0, %s63
      %s65 = sphi 0, %s63
      %s66 = sphi 0, %s65
      %s80 = sphi 0, %s66
      %s84 = sphi 0, %s84
      %s86 = sphi 0, %s84
      %s87 = sphi 0, %s86
      %s101 = sphi 0, %s87
      %s109 = sphi 0, %s111
      %s112 = sphi 0, %s109
      %s113 = sphi 0, %s112
      %s129 = sphi 0, %s113
    $region4: #{tpu_custom_call.1} parent=1 // loop_header_branch
      %18 = sbr.rel (%p16) target = $region8
    $region5: #{tpu_custom_call.1} parent=1 // loop_body
      %s20 = ssub.s32 %s15, 1
      %s21 = ssub.s32 %s15, 2
      %s28 = sadd.s32 1, %s23
      %p29 = scmp.ge.s32.totalorder %s28, 2
      %s30 = scalar_select %p29, 0, %s28
      %s31 = sadd.s32 1, %s22
      %s32 = scalar_select %p29, %s31, %s22
      %p33 = scmp.ge.s32.totalorder %s32, 2
      %s34 = scalar_select %p33, 0, %s32
      %s35 = ssub.s32 %s22, %s34
      %s36 = ssub.s32 %s23, %s30
      %s37 = sor.u32 %s35, %s36
      %p38 = scmp.eq.s32.totalorder %s37, 0
      %s40 = sadd.s32 %s39, 1
      %s41 = scalar_select %p38, %s39, %s40
      %p44 = pneg %p38
      %p45 = scmp.eq.s32.totalorder %s15, 3
      %p46 = por %p44, %p45
      %p47 = scmp.ne.s32.totalorder %s39, %s42
      %p48 = scmp.eq.s32.totalorder %s15, 0
      %p49 = por %p47, %p48
      %p50 = scmp.ne.s32.totalorder %s39, %s42
      %p51 = scmp.eq.s32.totalorder %s20, 3
      %p52 = por %p50, %p51
      %p53 = scmp.ne.s32.totalorder %s42, %s43
      %p54 = scmp.eq.s32.totalorder %s20, 0
      %p55 = por %p53, %p54
      %p56 = scmp.ne.s32.totalorder %s42, %s43
      %p57 = scmp.eq.s32.totalorder %s21, 3
      %p58 = por %p56, %p57
      %p60 = scmp.ne.s32.totalorder %s43, %s59
      %p61 = scmp.eq.s32.totalorder %s21, 0
      %p62 = por %p60, %p61
      %s64 = sadd.s32 %s63, 1
      %p67 = scmp.eq.s32.totalorder %s15, 3
      %p68 = scmp.ne.s32.totalorder %s63, %s65
      %p69 = scmp.eq.s32.totalorder %s15, 0
      %p70 = por %p68, %p69
      %p71 = scmp.ne.s32.totalorder %s63, %s65
      %p72 = scmp.eq.s32.totalorder %s20, 3
      %p73 = por %p71, %p72
      %p74 = scmp.ne.s32.totalorder %s65, %s66
      %p75 = scmp.eq.s32.totalorder %s20, 0
      %p76 = por %p74, %p75
      %p77 = scmp.ne.s32.totalorder %s65, %s66
      %p78 = scmp.eq.s32.totalorder %s21, 3
      %p79 = por %p77, %p78
      %p81 = scmp.ne.s32.totalorder %s66, %s80
      %p82 = scmp.eq.s32.totalorder %s21, 0
      %p83 = por %p81, %p82
      %s85 = sadd.s32 %s84, 1
      %p88 = scmp.eq.s32.totalorder %s15, 3
      %p89 = scmp.ne.s32.totalorder %s84, %s86
      %p90 = scmp.eq.s32.totalorder %s15, 0
      %p91 = por %p89, %p90
      %p92 = scmp.ne.s32.totalorder %s84, %s86
      %p93 = scmp.eq.s32.totalorder %s20, 3
      %p94 = por %p92, %p93
      %p95 = scmp.ne.s32.totalorder %s86, %s87
      %p96 = scmp.eq.s32.totalorder %s20, 0
      %p97 = por %p95, %p96
      %p98 = scmp.ne.s32.totalorder %s86, %s87
      %p99 = scmp.eq.s32.totalorder %s21, 3
      %p100 = por %p98, %p99
      %p102 = scmp.ne.s32.totalorder %s87, %s101
      %p103 = scmp.eq.s32.totalorder %s21, 0
      %p104 = por %p102, %p103
      %s105 = ssub.s32 %s22, %s34
      %s106 = ssub.s32 %s23, %s30
      %s107 = sor.u32 %s105, %s106
      %p108 = scmp.eq.s32.totalorder %s107, 0
      %s110 = sadd.s32 %s109, 1
      %s111 = scalar_select %p108, %s109, %s110
      %p114 = pneg %p108
      %p115 = scmp.eq.s32.totalorder %s15, 3
      %p116 = por %p114, %p115
      %p117 = scmp.ne.s32.totalorder %s109, %s112
      %p118 = scmp.eq.s32.totalorder %s15, 0
      %p119 = por %p117, %p118
      %p120 = scmp.ne.s32.totalorder %s109, %s112
      %p121 = scmp.eq.s32.totalorder %s20, 3
      %p122 = por %p120, %p121
      %p123 = scmp.ne.s32.totalorder %s112, %s113
      %p124 = scmp.eq.s32.totalorder %s20, 0
      %p125 = por %p123, %p124
      %p126 = scmp.ne.s32.totalorder %s112, %s113
      %p127 = scmp.eq.s32.totalorder %s21, 3
      %p128 = por %p126, %p127
      %p130 = scmp.ne.s32.totalorder %s113, %s129
      %p131 = scmp.eq.s32.totalorder %s21, 0
      %p132 = por %p130, %p131
      %p133 = scmp.le.s32.totalorder 1, %s15
      %p134 = scmp.lt.s32.totalorder %s15, 5
      %p135 = pnand %p133, %p134
      %p136 = pneg %p135
      // Predicated region
      $region9: #{tpu_custom_call.1} parent=5 // pred_check
        _
      $region10: #{tpu_custom_call.1} parent=5 // pred_check_branch
        %138 = sbr.rel (%p135) target = $region12
      $region11: #{tpu_custom_call.1} parent=5 // pred_region
        %s139 = ssub.s32 %s15, 1
        // Predicated region
        $region13: #{tpu_custom_call.1} parent=11 // pred_check
          %p140 = pneg %p76
        $region14: #{tpu_custom_call.1} parent=11 // pred_check_branch
          %142 = sbr.rel (%p140) target = $region16
        $region15: #{tpu_custom_call.1} parent=11 // pred_region
          _
        $region16: #{tpu_custom_call.1} parent=11 // pred_fallthru
          _
        // Predicated region
        $region17: #{tpu_custom_call.1} parent=11 // pred_check
          %p143 = pneg %p97
        $region18: #{tpu_custom_call.1} parent=11 // pred_check_branch
          %145 = sbr.rel (%p143) target = $region20
        $region19: #{tpu_custom_call.1} parent=11 // pred_region
          _
        $region20: #{tpu_custom_call.1} parent=11 // pred_fallthru
          _
      $region12: #{tpu_custom_call.1} parent=5 // pred_fallthru
        _
      %p146 = scmp.lt.s32.totalorder %s15, 4
      // Predicated region
      $region21: #{tpu_custom_call.1} parent=5 // pred_check
        %p147 = pneg %p146
      $region22: #{tpu_custom_call.1} parent=5 // pred_check_branch
        %149 = sbr.rel (%p147) target = $region24
      $region23: #{tpu_custom_call.1} parent=5 // pred_region
        // Predicated region
        $region25: #{tpu_custom_call.1} parent=23 // pred_check
          %p150 = pneg %p49
        $region26: #{tpu_custom_call.1} parent=23 // pred_check_branch
          %152 = sbr.rel (%p150) target = $region28
        $region27: #{tpu_custom_call.1} parent=23 // pred_region
          %s153 = sand.u32 %s39, 1
          %s154 = scalar_lea.sflag [#allocation3], %s153
          %s155 = sand.u32 %s39, 1
          %s156 = smul.addr %s155, 32
          %s157 = scalar_lea.vmem [#allocation2], %s156
          %s158 = smul.u32 8, %s23
          %s160 = ssub.s32 512, 512
          %161 = vsyncadd %s154, %s160
          %s162 = smul.addr %s22, 16
          %s163 = sadd.s32 %s158, %s162
          %s164 = smul.addr %s163, 64
          %s165 = scalar_lea.hbm %s0, %s164
          %s166 = sshll.u32 %s157, 4
          %s167 = int_to_ptr.vmem [resolvable:$true] %s166
          %172 = dma.hbm_to_vmem [thread:$0]  %s165, 512, %s167, %s154, 64, 64, 4
        $region28: #{tpu_custom_call.1} parent=23 // pred_fallthru
          _
      $region24: #{tpu_custom_call.1} parent=5 // pred_fallthru
        _
      %p173 = scmp.le.s32.totalorder 1, %s15
      %p174 = scmp.lt.s32.totalorder %s15, 5
      %p175 = pnand %p173, %p174
      %p176 = pneg %p175
      // Predicated region
      $region29: #{tpu_custom_call.1} parent=5 // pred_check
        _
      $region30: #{tpu_custom_call.1} parent=5 // pred_check_branch
        %178 = sbr.rel (%p175) target = $region32
      $region31: #{tpu_custom_call.1} parent=5 // pred_region
        %s179 = ssub.s32 %s15, 1
        %s180 = sand.u32 %s42, 1
        %s181 = scalar_lea.sflag [#allocation3], %s180
        %s182 = sand.u32 %s42, 1
        %s183 = smul.addr %s182, 32
        %s184 = scalar_lea.vmem [#allocation2], %s183
        // Predicated region
        $region33: #{tpu_custom_call.1} parent=31 // pred_check
          %p185 = pneg %p55
        $region34: #{tpu_custom_call.1} parent=31 // pred_check_branch
          %187 = sbr.rel (%p185) target = $region36
        $region35: #{tpu_custom_call.1} parent=31 // pred_region
          %188 = dma.done %s181, 512
        $region36: #{tpu_custom_call.1} parent=31 // pred_fallthru
          _
        %s189 = sand.u32 %s42, 1
        %s190 = scalar_lea.sflag [#allocation3], %s189
        %s191 = sand.u32 %s42, 1
        %s192 = smul.addr %s191, 32
        %s193 = scalar_lea.vmem [#allocation2], %s192
        %p194 = pneg %p55
        %p195 = pneg %p52
        %p196 = pneg %p76
        %p197 = pneg %p73
        %p198 = pneg %p97
        %p199 = pneg %p94
        %p200 = pneg %p125
        %p201 = pneg %p122
        %s202 = sand.u32 %s112, 1
        %s203 = scalar_lea.sflag [#allocation4], %s202
        %s204 = sand.u32 %s112, 1
        %s205 = smul.addr %s204, 64
        %s206 = scalar_lea.vmem [#allocation5], %s205
        %s207 = smul.u32 8, %s25
        %s208 = smul.u32 8, %s25
        %v209 = vld [vmem:[%s1] sm:$0xff]
        %v210 = vld [vmem:[%s2] sm:$0xff]
        %v211 = vld [vmem:[%s184] sm:$0xf]
        %213 = vset.pattern.permute.xlu0 0
        %214 = vperm.xlu0 %213, %v210
        %v215 = vpop.permute.xlu0 %214
        %vm217 = vcmask 31744
        %v219 = vsel %vm217, %v209, 0
        %vm221 = vcmask 1043456
        %v223 = vsel %vm221, %v211, 0
        %225 = vmatprep.subr.mxu0 0.0
        %226 = vmatpush1.msra.mxu0 %v223
        %227 = vmatprep.subr.mxu0 0.0
        %228 = vmatpush1.msra.mxu0 0.0
        %229 = vmatprep.subr.mxu0 0.0
        %230 = vmatpush1.msra.mxu0 0.0
        %231 = vmatprep.subr.mxu0 0.0
        %232 = vmatpush1.msra.mxu0 0.0
        %233 = vmatprep.subr.mxu0 0.0
        %234 = vmatpush1.msra.mxu0 0.0
        %235 = vmatprep.subr.mxu0 0.0
        %236 = vmatpush1.msra.mxu0 0.0
        %237 = vmatprep.subr.mxu0 0.0
        %238 = vmatpush1.msra.mxu0 0.0
        %239 = vmatprep.subr.mxu0 0.0
        %240 = vmatpush1.msra.mxu0 0.0
        %241 = vmatprep.subr.mxu0 0.0
        %242 = vmatpush1.msra.mxu0 0.0
        %243 = vmatprep.subr.mxu0 0.0
        %244 = vmatpush1.msra.mxu0 0.0
        %245 = vmatprep.subr.mxu0 0.0
        %246 = vmatpush1.msra.mxu0 0.0
        %247 = vmatprep.subr.mxu0 0.0
        %248 = vmatpush1.msra.mxu0 0.0
        %249 = vmatprep.subr.mxu0 0.0
        %250 = vmatpush1.msra.mxu0 0.0
        %251 = vmatprep.subr.mxu0 0.0
        %252 = vmatpush1.msra.mxu0 0.0
        %253 = vmatprep.subr.mxu0 0.0
        %254 = vmatpush1.msra.mxu0 0.0
        %255 = vmatprep.subr.mxu0 0.0
        %256 = vmatpush1.msra.mxu0 0.0
        %257 = vmatprep.subr.mxu0 0.0
        %258 = vmatpush1.msra.mxu0 0.0
        %259 = vmatprep.subr.mxu0 0.0
        %260 = vmatpush1.msra.mxu0 0.0
        %261 = vmatprep.subr.mxu0 0.0
        %262 = vmatpush1.msra.mxu0 0.0
        %263 = vmatprep.subr.mxu0 0.0
        %264 = vmatpush1.msra.mxu0 0.0
        %265 = vmatprep.subr.mxu0 0.0
        %266 = vmatpush1.msra.mxu0 0.0
        %267 = vmatprep.subr.mxu0 0.0
        %268 = vmatpush1.msra.mxu0 0.0
        %269 = vmatprep.subr.mxu0 0.0
        %270 = vmatpush1.msra.mxu0 0.0
        %271 = vmatprep.subr.mxu0 0.0
        %272 = vmatpush1.msra.mxu0 0.0
        %273 = vmatprep.subr.mxu0 0.0
        %274 = vmatpush1.msra.mxu0 0.0
        %275 = vmatprep.subr.mxu0 0.0
        %276 = vmatpush1.msra.mxu0 0.0
        %277 = vmatprep.subr.mxu0 0.0
        %278 = vmatpush1.msra.mxu0 0.0
        %279 = vmatprep.subr.mxu0 0.0
        %280 = vmatpush1.msra.mxu0 0.0
        %281 = vmatprep.subr.mxu0 0.0
        %282 = vmatpush1.msra.mxu0 0.0
        %283 = vmatprep.subr.mxu0 0.0
        %284 = vmatpush1.msra.mxu0 0.0
        %285 = vmatprep.subr.mxu0 0.0
        %286 = vmatpush1.msra.mxu0 0.0
        %287 = vmatprep.subr.mxu0 0.0
        %288 = vmatpush1.msra.mxu0 0.0
        %289 = vmatprep.mubr.f32.mxu0 0.0
        %290 = vmatmul.mubr.f32.gmra.mrb[0].mxu0 %v219
        %v291 = vpop.f32.mrb[0].mxu0
        %v292 = vadd.f32 %v215, %v291
        %v293 = vpop.f32.mrb[0].mxu0
        %294 = vdwg.mxu0
        %vm295 = vcmask 130048
        %296 = vst.msk [vmem:[%s206] sm:$0xff] %vm295, %v292
        %s297 = scalar_lea.vmem %s184, 4 [#allocation2]
        %v298 = vld [vmem:[%s297] sm:$0xf]
        %v300 = vsel %vm221, %v298, 0
        %302 = vmatprep.subr.mxu0 0.0
        %303 = vmatpush1.msra.mxu0 %v300
        %304 = vmatprep.subr.mxu0 0.0
        %305 = vmatpush1.msra.mxu0 0.0
        %306 = vmatprep.subr.mxu0 0.0
        %307 = vmatpush1.msra.mxu0 0.0
        %308 = vmatprep.subr.mxu0 0.0
        %309 = vmatpush1.msra.mxu0 0.0
        %310 = vmatprep.subr.mxu0 0.0
        %311 = vmatpush1.msra.mxu0 0.0
        %312 = vmatprep.subr.mxu0 0.0
        %313 = vmatpush1.msra.mxu0 0.0
        %314 = vmatprep.subr.mxu0 0.0
        %315 = vmatpush1.msra.mxu0 0.0
        %316 = vmatprep.subr.mxu0 0.0
        %317 = vmatpush1.msra.mxu0 0.0
        %318 = vmatprep.subr.mxu0 0.0
        %319 = vmatpush1.msra.mxu0 0.0
        %320 = vmatprep.subr.mxu0 0.0
        %321 = vmatpush1.msra.mxu0 0.0
        %322 = vmatprep.subr.mxu0 0.0
        %323 = vmatpush1.msra.mxu0 0.0
        %324 = vmatprep.subr.mxu0 0.0
        %325 = vmatpush1.msra.mxu0 0.0
        %326 = vmatprep.subr.mxu0 0.0
        %327 = vmatpush1.msra.mxu0 0.0
        %328 = vmatprep.subr.mxu0 0.0
        %329 = vmatpush1.msra.mxu0 0.0
        %330 = vmatprep.subr.mxu0 0.0
        %331 = vmatpush1.msra.mxu0 0.0
        %332 = vmatprep.subr.mxu0 0.0
        %333 = vmatpush1.msra.mxu0 0.0
        %334 = vmatprep.subr.mxu0 0.0
        %335 = vmatpush1.msra.mxu0 0.0
        %336 = vmatprep.subr.mxu0 0.0
        %337 = vmatpush1.msra.mxu0 0.0
        %338 = vmatprep.subr.mxu0 0.0
        %339 = vmatpush1.msra.mxu0 0.0
        %340 = vmatprep.subr.mxu0 0.0
        %341 = vmatpush1.msra.mxu0 0.0
        %342 = vmatprep.subr.mxu0 0.0
        %343 = vmatpush1.msra.mxu0 0.0
        %344 = vmatprep.subr.mxu0 0.0
        %345 = vmatpush1.msra.mxu0 0.0
        %346 = vmatprep.subr.mxu0 0.0
        %347 = vmatpush1.msra.mxu0 0.0
        %348 = vmatprep.subr.mxu0 0.0
        %349 = vmatpush1.msra.mxu0 0.0
        %350 = vmatprep.subr.mxu0 0.0
        %351 = vmatpush1.msra.mxu0 0.0
        %352 = vmatprep.subr.mxu0 0.0
        %353 = vmatpush1.msra.mxu0 0.0
        %354 = vmatprep.subr.mxu0 0.0
        %355 = vmatpush1.msra.mxu0 0.0
        %356 = vmatprep.subr.mxu0 0.0
        %357 = vmatpush1.msra.mxu0 0.0
        %358 = vmatprep.subr.mxu0 0.0
        %359 = vmatpush1.msra.mxu0 0.0
        %360 = vmatprep.subr.mxu0 0.0
        %361 = vmatpush1.msra.mxu0 0.0
        %362 = vmatprep.subr.mxu0 0.0
        %363 = vmatpush1.msra.mxu0 0.0
        %364 = vmatprep.subr.mxu0 0.0
        %365 = vmatpush1.msra.mxu0 0.0
        %366 = vmatprep.mubr.f32.mxu0 0.0
        %367 = vmatmul.mubr.f32.gmra.mrb[0].mxu0 %v219
        %v368 = vpop.f32.mrb[0].mxu0
        %v369 = vadd.f32 %v215, %v368
        %v370 = vpop.f32.mrb[0].mxu0
        %371 = vdwg.mxu0
        %s372 = scalar_lea.vmem %s206, 8 [#allocation5]
        %373 = vst.msk [vmem:[%s372] sm:$0xff] %vm295, %v369
        %s374 = scalar_lea.vmem %s184, 8 [#allocation2]
        %v375 = vld [vmem:[%s374] sm:$0xf]
        %v377 = vsel %vm221, %v375, 0
        %379 = vmatprep.subr.mxu0 0.0
        %380 = vmatpush1.msra.mxu0 %v377
        %381 = vmatprep.subr.mxu0 0.0
        %382 = vmatpush1.msra.mxu0 0.0
        %383 = vmatprep.subr.mxu0 0.0
        %384 = vmatpush1.msra.mxu0 0.0
        %385 = vmatprep.subr.mxu0 0.0
        %386 = vmatpush1.msra.mxu0 0.0
        %387 = vmatprep.subr.mxu0 0.0
        %388 = vmatpush1.msra.mxu0 0.0
        %389 = vmatprep.subr.mxu0 0.0
        %390 = vmatpush1.msra.mxu0 0.0
        %391 = vmatprep.subr.mxu0 0.0
        %392 = vmatpush1.msra.mxu0 0.0
        %393 = vmatprep.subr.mxu0 0.0
        %394 = vmatpush1.msra.mxu0 0.0
        %395 = vmatprep.subr.mxu0 0.0
        %396 = vmatpush1.msra.mxu0 0.0
        %397 = vmatprep.subr.mxu0 0.0
        %398 = vmatpush1.msra.mxu0 0.0
        %399 = vmatprep.subr.mxu0 0.0
        %400 = vmatpush1.msra.mxu0 0.0
        %401 = vmatprep.subr.mxu0 0.0
        %402 = vmatpush1.msra.mxu0 0.0
        %403 = vmatprep.subr.mxu0 0.0
        %404 = vmatpush1.msra.mxu0 0.0
        %405 = vmatprep.subr.mxu0 0.0
        %406 = vmatpush1.msra.mxu0 0.0
        %407 = vmatprep.subr.mxu0 0.0
        %408 = vmatpush1.msra.mxu0 0.0
        %409 = vmatprep.subr.mxu0 0.0
        %410 = vmatpush1.msra.mxu0 0.0
        %411 = vmatprep.subr.mxu0 0.0
        %412 = vmatpush1.msra.mxu0 0.0
        %413 = vmatprep.subr.mxu0 0.0
        %414 = vmatpush1.msra.mxu0 0.0
        %415 = vmatprep.subr.mxu0 0.0
        %416 = vmatpush1.msra.mxu0 0.0
        %417 = vmatprep.subr.mxu0 0.0
        %418 = vmatpush1.msra.mxu0 0.0
        %419 = vmatprep.subr.mxu0 0.0
        %420 = vmatpush1.msra.mxu0 0.0
        %421 = vmatprep.subr.mxu0 0.0
        %422 = vmatpush1.msra.mxu0 0.0
        %423 = vmatprep.subr.mxu0 0.0
        %424 = vmatpush1.msra.mxu0 0.0
        %425 = vmatprep.subr.mxu0 0.0
        %426 = vmatpush1.msra.mxu0 0.0
        %427 = vmatprep.subr.mxu0 0.0
        %428 = vmatpush1.msra.mxu0 0.0
        %429 = vmatprep.subr.mxu0 0.0
        %430 = vmatpush1.msra.mxu0 0.0
        %431 = vmatprep.subr.mxu0 0.0
        %432 = vmatpush1.msra.mxu0 0.0
        %433 = vmatprep.subr.mxu0 0.0
        %434 = vmatpush1.msra.mxu0 0.0
        %435 = vmatprep.subr.mxu0 0.0
        %436 = vmatpush1.msra.mxu0 0.0
        %437 = vmatprep.subr.mxu0 0.0
        %438 = vmatpush1.msra.mxu0 0.0
        %439 = vmatprep.subr.mxu0 0.0
        %440 = vmatpush1.msra.mxu0 0.0
        %441 = vmatprep.subr.mxu0 0.0
        %442 = vmatpush1.msra.mxu0 0.0
        %443 = vmatprep.mubr.f32.mxu0 0.0
        %444 = vmatmul.mubr.f32.gmra.mrb[0].mxu0 %v219
        %v445 = vpop.f32.mrb[0].mxu0
        %v446 = vadd.f32 %v215, %v445
        %v447 = vpop.f32.mrb[0].mxu0
        %448 = vdwg.mxu0
        %s449 = scalar_lea.vmem %s206, 16 [#allocation5]
        %450 = vst.msk [vmem:[%s449] sm:$0xff] %vm295, %v446
        %s451 = scalar_lea.vmem %s184, 12 [#allocation2]
        %v452 = vld [vmem:[%s451] sm:$0xf]
        %v454 = vsel %vm221, %v452, 0
        %456 = vmatprep.subr.mxu0 0.0
        %457 = vmatpush1.msra.mxu0 %v454
        %458 = vmatprep.subr.mxu0 0.0
        %459 = vmatpush1.msra.mxu0 0.0
        %460 = vmatprep.subr.mxu0 0.0
        %461 = vmatpush1.msra.mxu0 0.0
        %462 = vmatprep.subr.mxu0 0.0
        %463 = vmatpush1.msra.mxu0 0.0
        %464 = vmatprep.subr.mxu0 0.0
        %465 = vmatpush1.msra.mxu0 0.0
        %466 = vmatprep.subr.mxu0 0.0
        %467 = vmatpush1.msra.mxu0 0.0
        %468 = vmatprep.subr.mxu0 0.0
        %469 = vmatpush1.msra.mxu0 0.0
        %470 = vmatprep.subr.mxu0 0.0
        %471 = vmatpush1.msra.mxu0 0.0
        %472 = vmatprep.subr.mxu0 0.0
        %473 = vmatpush1.msra.mxu0 0.0
        %474 = vmatprep.subr.mxu0 0.0
        %475 = vmatpush1.msra.mxu0 0.0
        %476 = vmatprep.subr.mxu0 0.0
        %477 = vmatpush1.msra.mxu0 0.0
        %478 = vmatprep.subr.mxu0 0.0
        %479 = vmatpush1.msra.mxu0 0.0
        %480 = vmatprep.subr.mxu0 0.0
        %481 = vmatpush1.msra.mxu0 0.0
        %482 = vmatprep.subr.mxu0 0.0
        %483 = vmatpush1.msra.mxu0 0.0
        %484 = vmatprep.subr.mxu0 0.0
        %485 = vmatpush1.msra.mxu0 0.0
        %486 = vmatprep.subr.mxu0 0.0
        %487 = vmatpush1.msra.mxu0 0.0
        %488 = vmatprep.subr.mxu0 0.0
        %489 = vmatpush1.msra.mxu0 0.0
        %490 = vmatprep.subr.mxu0 0.0
        %491 = vmatpush1.msra.mxu0 0.0
        %492 = vmatprep.subr.mxu0 0.0
        %493 = vmatpush1.msra.mxu0 0.0
        %494 = vmatprep.subr.mxu0 0.0
        %495 = vmatpush1.msra.mxu0 0.0
        %496 = vmatprep.subr.mxu0 0.0
        %497 = vmatpush1.msra.mxu0 0.0
        %498 = vmatprep.subr.mxu0 0.0
        %499 = vmatpush1.msra.mxu0 0.0
        %500 = vmatprep.subr.mxu0 0.0
        %501 = vmatpush1.msra.mxu0 0.0
        %502 = vmatprep.subr.mxu0 0.0
        %503 = vmatpush1.msra.mxu0 0.0
        %504 = vmatprep.subr.mxu0 0.0
        %505 = vmatpush1.msra.mxu0 0.0
        %506 = vmatprep.subr.mxu0 0.0
        %507 = vmatpush1.msra.mxu0 0.0
        %508 = vmatprep.subr.mxu0 0.0
        %509 = vmatpush1.msra.mxu0 0.0
        %510 = vmatprep.subr.mxu0 0.0
        %511 = vmatpush1.msra.mxu0 0.0
        %512 = vmatprep.subr.mxu0 0.0
        %513 = vmatpush1.msra.mxu0 0.0
        %514 = vmatprep.subr.mxu0 0.0
        %515 = vmatpush1.msra.mxu0 0.0
        %516 = vmatprep.subr.mxu0 0.0
        %517 = vmatpush1.msra.mxu0 0.0
        %518 = vmatprep.subr.mxu0 0.0
        %519 = vmatpush1.msra.mxu0 0.0
        %520 = vmatprep.mubr.f32.mxu0 0.0
        %521 = vmatmul.mubr.f32.gmra.mrb[0].mxu0 %v219
        %v522 = vpop.f32.mrb[0].mxu0
        %v523 = vadd.f32 %v215, %v522
        %v524 = vpop.f32.mrb[0].mxu0
        %525 = vdwg.mxu0
        %s526 = scalar_lea.vmem %s206, 24 [#allocation5]
        %527 = vst.msk [vmem:[%s526] sm:$0xff] %vm295, %v523
        %s528 = scalar_lea.vmem %s184, 16 [#allocation2]
        %v529 = vld [vmem:[%s528] sm:$0xf]
        %v531 = vsel %vm221, %v529, 0
        %533 = vmatprep.subr.mxu0 0.0
        %534 = vmatpush1.msra.mxu0 %v531
        %535 = vmatprep.subr.mxu0 0.0
        %536 = vmatpush1.msra.mxu0 0.0
        %537 = vmatprep.subr.mxu0 0.0
        %538 = vmatpush1.msra.mxu0 0.0
        %539 = vmatprep.subr.mxu0 0.0
        %540 = vmatpush1.msra.mxu0 0.0
        %541 = vmatprep.subr.mxu0 0.0
        %542 = vmatpush1.msra.mxu0 0.0
        %543 = vmatprep.subr.mxu0 0.0
        %544 = vmatpush1.msra.mxu0 0.0
        %545 = vmatprep.subr.mxu0 0.0
        %546 = vmatpush1.msra.mxu0 0.0
        %547 = vmatprep.subr.mxu0 0.0
        %548 = vmatpush1.msra.mxu0 0.0
        %549 = vmatprep.subr.mxu0 0.0
        %550 = vmatpush1.msra.mxu0 0.0
        %551 = vmatprep.subr.mxu0 0.0
        %552 = vmatpush1.msra.mxu0 0.0
        %553 = vmatprep.subr.mxu0 0.0
        %554 = vmatpush1.msra.mxu0 0.0
        %555 = vmatprep.subr.mxu0 0.0
        %556 = vmatpush1.msra.mxu0 0.0
        %557 = vmatprep.subr.mxu0 0.0
        %558 = vmatpush1.msra.mxu0 0.0
        %559 = vmatprep.subr.mxu0 0.0
        %560 = vmatpush1.msra.mxu0 0.0
        %561 = vmatprep.subr.mxu0 0.0
        %562 = vmatpush1.msra.mxu0 0.0
        %563 = vmatprep.subr.mxu0 0.0
        %564 = vmatpush1.msra.mxu0 0.0
        %565 = vmatprep.subr.mxu0 0.0
        %566 = vmatpush1.msra.mxu0 0.0
        %567 = vmatprep.subr.mxu0 0.0
        %568 = vmatpush1.msra.mxu0 0.0
        %569 = vmatprep.subr.mxu0 0.0
        %570 = vmatpush1.msra.mxu0 0.0
        %571 = vmatprep.subr.mxu0 0.0
        %572 = vmatpush1.msra.mxu0 0.0
        %573 = vmatprep.subr.mxu0 0.0
        %574 = vmatpush1.msra.mxu0 0.0
        %575 = vmatprep.subr.mxu0 0.0
        %576 = vmatpush1.msra.mxu0 0.0
        %577 = vmatprep.subr.mxu0 0.0
        %578 = vmatpush1.msra.mxu0 0.0
        %579 = vmatprep.subr.mxu0 0.0
        %580 = vmatpush1.msra.mxu0 0.0
        %581 = vmatprep.subr.mxu0 0.0
        %582 = vmatpush1.msra.mxu0 0.0
        %583 = vmatprep.subr.mxu0 0.0
        %584 = vmatpush1.msra.mxu0 0.0
        %585 = vmatprep.subr.mxu0 0.0
        %586 = vmatpush1.msra.mxu0 0.0
        %587 = vmatprep.subr.mxu0 0.0
        %588 = vmatpush1.msra.mxu0 0.0
        %589 = vmatprep.subr.mxu0 0.0
        %590 = vmatpush1.msra.mxu0 0.0
        %591 = vmatprep.subr.mxu0 0.0
        %592 = vmatpush1.msra.mxu0 0.0
        %593 = vmatprep.subr.mxu0 0.0
        %594 = vmatpush1.msra.mxu0 0.0
        %595 = vmatprep.subr.mxu0 0.0
        %596 = vmatpush1.msra.mxu0 0.0
        %597 = vmatprep.mubr.f32.mxu0 0.0
        %598 = vmatmul.mubr.f32.gmra.mrb[0].mxu0 %v219
        %v599 = vpop.f32.mrb[0].mxu0
        %v600 = vadd.f32 %v215, %v599
        %v601 = vpop.f32.mrb[0].mxu0
        %602 = vdwg.mxu0
        %s603 = scalar_lea.vmem %s206, 32 [#allocation5]
        %604 = vst.msk [vmem:[%s603] sm:$0xff] %vm295, %v600
        %s605 = scalar_lea.vmem %s184, 20 [#allocation2]
        %v606 = vld [vmem:[%s605] sm:$0xf]
        %v608 = vsel %vm221, %v606, 0
        %610 = vmatprep.subr.mxu0 0.0
        %611 = vmatpush1.msra.mxu0 %v608
        %612 = vmatprep.subr.mxu0 0.0
        %613 = vmatpush1.msra.mxu0 0.0
        %614 = vmatprep.subr.mxu0 0.0
        %615 = vmatpush1.msra.mxu0 0.0
        %616 = vmatprep.subr.mxu0 0.0
        %617 = vmatpush1.msra.mxu0 0.0
        %618 = vmatprep.subr.mxu0 0.0
        %619 = vmatpush1.msra.mxu0 0.0
        %620 = vmatprep.subr.mxu0 0.0
        %621 = vmatpush1.msra.mxu0 0.0
        %622 = vmatprep.subr.mxu0 0.0
        %623 = vmatpush1.msra.mxu0 0.0
        %624 = vmatprep.subr.mxu0 0.0
        %625 = vmatpush1.msra.mxu0 0.0
        %626 = vmatprep.subr.mxu0 0.0
        %627 = vmatpush1.msra.mxu0 0.0
        %628 = vmatprep.subr.mxu0 0.0
        %629 = vmatpush1.msra.mxu0 0.0
        %630 = vmatprep.subr.mxu0 0.0
        %631 = vmatpush1.msra.mxu0 0.0
        %632 = vmatprep.subr.mxu0 0.0
        %633 = vmatpush1.msra.mxu0 0.0
        %634 = vmatprep.subr.mxu0 0.0
        %635 = vmatpush1.msra.mxu0 0.0
        %636 = vmatprep.subr.mxu0 0.0
        %637 = vmatpush1.msra.mxu0 0.0
        %638 = vmatprep.subr.mxu0 0.0
        %639 = vmatpush1.msra.mxu0 0.0
        %640 = vmatprep.subr.mxu0 0.0
        %641 = vmatpush1.msra.mxu0 0.0
        %642 = vmatprep.subr.mxu0 0.0
        %643 = vmatpush1.msra.mxu0 0.0
        %644 = vmatprep.subr.mxu0 0.0
        %645 = vmatpush1.msra.mxu0 0.0
        %646 = vmatprep.subr.mxu0 0.0
        %647 = vmatpush1.msra.mxu0 0.0
        %648 = vmatprep.subr.mxu0 0.0
        %649 = vmatpush1.msra.mxu0 0.0
        %650 = vmatprep.subr.mxu0 0.0
        %651 = vmatpush1.msra.mxu0 0.0
        %652 = vmatprep.subr.mxu0 0.0
        %653 = vmatpush1.msra.mxu0 0.0
        %654 = vmatprep.subr.mxu0 0.0
        %655 = vmatpush1.msra.mxu0 0.0
        %656 = vmatprep.subr.mxu0 0.0
        %657 = vmatpush1.msra.mxu0 0.0
        %658 = vmatprep.subr.mxu0 0.0
        %659 = vmatpush1.msra.mxu0 0.0
        %660 = vmatprep.subr.mxu0 0.0
        %661 = vmatpush1.msra.mxu0 0.0
        %662 = vmatprep.subr.mxu0 0.0
        %663 = vmatpush1.msra.mxu0 0.0
        %664 = vmatprep.subr.mxu0 0.0
        %665 = vmatpush1.msra.mxu0 0.0
        %666 = vmatprep.subr.mxu0 0.0
        %667 = vmatpush1.msra.mxu0 0.0
        %668 = vmatprep.subr.mxu0 0.0
        %669 = vmatpush1.msra.mxu0 0.0
        %670 = vmatprep.subr.mxu0 0.0
        %671 = vmatpush1.msra.mxu0 0.0
        %672 = vmatprep.subr.mxu0 0.0
        %673 = vmatpush1.msra.mxu0 0.0
        %674 = vmatprep.mubr.f32.mxu0 0.0
        %675 = vmatmul.mubr.f32.gmra.mrb[0].mxu0 %v219
        %v676 = vpop.f32.mrb[0].mxu0
        %v677 = vadd.f32 %v215, %v676
        %v678 = vpop.f32.mrb[0].mxu0
        %679 = vdwg.mxu0
        %s680 = scalar_lea.vmem %s206, 40 [#allocation5]
        %681 = vst.msk [vmem:[%s680] sm:$0xff] %vm295, %v677
        %s682 = scalar_lea.vmem %s184, 24 [#allocation2]
        %v683 = vld [vmem:[%s682] sm:$0xf]
        %v685 = vsel %vm221, %v683, 0
        %687 = vmatprep.subr.mxu0 0.0
        %688 = vmatpush1.msra.mxu0 %v685
        %689 = vmatprep.subr.mxu0 0.0
        %690 = vmatpush1.msra.mxu0 0.0
        %691 = vmatprep.subr.mxu0 0.0
        %692 = vmatpush1.msra.mxu0 0.0
        %693 = vmatprep.subr.mxu0 0.0
        %694 = vmatpush1.msra.mxu0 0.0
        %695 = vmatprep.subr.mxu0 0.0
        %696 = vmatpush1.msra.mxu0 0.0
        %697 = vmatprep.subr.mxu0 0.0
        %698 = vmatpush1.msra.mxu0 0.0
        %699 = vmatprep.subr.mxu0 0.0
        %700 = vmatpush1.msra.mxu0 0.0
        %701 = vmatprep.subr.mxu0 0.0
        %702 = vmatpush1.msra.mxu0 0.0
        %703 = vmatprep.subr.mxu0 0.0
        %704 = vmatpush1.msra.mxu0 0.0
        %705 = vmatprep.subr.mxu0 0.0
        %706 = vmatpush1.msra.mxu0 0.0
        %707 = vmatprep.subr.mxu0 0.0
        %708 = vmatpush1.msra.mxu0 0.0
        %709 = vmatprep.subr.mxu0 0.0
        %710 = vmatpush1.msra.mxu0 0.0
        %711 = vmatprep.subr.mxu0 0.0
        %712 = vmatpush1.msra.mxu0 0.0
        %713 = vmatprep.subr.mxu0 0.0
        %714 = vmatpush1.msra.mxu0 0.0
        %715 = vmatprep.subr.mxu0 0.0
        %716 = vmatpush1.msra.mxu0 0.0
        %717 = vmatprep.subr.mxu0 0.0
        %718 = vmatpush1.msra.mxu0 0.0
        %719 = vmatprep.subr.mxu0 0.0
        %720 = vmatpush1.msra.mxu0 0.0
        %721 = vmatprep.subr.mxu0 0.0
        %722 = vmatpush1.msra.mxu0 0.0
        %723 = vmatprep.subr.mxu0 0.0
        %724 = vmatpush1.msra.mxu0 0.0
        %725 = vmatprep.subr.mxu0 0.0
        %726 = vmatpush1.msra.mxu0 0.0
        %727 = vmatprep.subr.mxu0 0.0
        %728 = vmatpush1.msra.mxu0 0.0
        %729 = vmatprep.subr.mxu0 0.0
        %730 = vmatpush1.msra.mxu0 0.0
        %731 = vmatprep.subr.mxu0 0.0
        %732 = vmatpush1.msra.mxu0 0.0
        %733 = vmatprep.subr.mxu0 0.0
        %734 = vmatpush1.msra.mxu0 0.0
        %735 = vmatprep.subr.mxu0 0.0
        %736 = vmatpush1.msra.mxu0 0.0
        %737 = vmatprep.subr.mxu0 0.0
        %738 = vmatpush1.msra.mxu0 0.0
        %739 = vmatprep.subr.mxu0 0.0
        %740 = vmatpush1.msra.mxu0 0.0
        %741 = vmatprep.subr.mxu0 0.0
        %742 = vmatpush1.msra.mxu0 0.0
        %743 = vmatprep.subr.mxu0 0.0
        %744 = vmatpush1.msra.mxu0 0.0
        %745 = vmatprep.subr.mxu0 0.0
        %746 = vmatpush1.msra.mxu0 0.0
        %747 = vmatprep.subr.mxu0 0.0
        %748 = vmatpush1.msra.mxu0 0.0
        %749 = vmatprep.subr.mxu0 0.0
        %750 = vmatpush1.msra.mxu0 0.0
        %751 = vmatprep.mubr.f32.mxu0 0.0
        %752 = vmatmul.mubr.f32.gmra.mrb[0].mxu0 %v219
        %v753 = vpop.f32.mrb[0].mxu0
        %v754 = vadd.f32 %v215, %v753
        %v755 = vpop.f32.mrb[0].mxu0
        %756 = vdwg.mxu0
        %s757 = scalar_lea.vmem %s206, 48 [#allocation5]
        %758 = vst.msk [vmem:[%s757] sm:$0xff] %vm295, %v754
        %s759 = scalar_lea.vmem %s184, 28 [#allocation2]
        %v760 = vld [vmem:[%s759] sm:$0xf]
        %v762 = vsel %vm221, %v760, 0
        %764 = vmatprep.subr.mxu0 0.0
        %765 = vmatpush1.msra.mxu0 %v762
        %766 = vmatprep.subr.mxu0 0.0
        %767 = vmatpush1.msra.mxu0 0.0
        %768 = vmatprep.subr.mxu0 0.0
        %769 = vmatpush1.msra.mxu0 0.0
        %770 = vmatprep.subr.mxu0 0.0
        %771 = vmatpush1.msra.mxu0 0.0
        %772 = vmatprep.subr.mxu0 0.0
        %773 = vmatpush1.msra.mxu0 0.0
        %774 = vmatprep.subr.mxu0 0.0
        %775 = vmatpush1.msra.mxu0 0.0
        %776 = vmatprep.subr.mxu0 0.0
        %777 = vmatpush1.msra.mxu0 0.0
        %778 = vmatprep.subr.mxu0 0.0
        %779 = vmatpush1.msra.mxu0 0.0
        %780 = vmatprep.subr.mxu0 0.0
        %781 = vmatpush1.msra.mxu0 0.0
        %782 = vmatprep.subr.mxu0 0.0
        %783 = vmatpush1.msra.mxu0 0.0
        %784 = vmatprep.subr.mxu0 0.0
        %785 = vmatpush1.msra.mxu0 0.0
        %786 = vmatprep.subr.mxu0 0.0
        %787 = vmatpush1.msra.mxu0 0.0
        %788 = vmatprep.subr.mxu0 0.0
        %789 = vmatpush1.msra.mxu0 0.0
        %790 = vmatprep.subr.mxu0 0.0
        %791 = vmatpush1.msra.mxu0 0.0
        %792 = vmatprep.subr.mxu0 0.0
        %793 = vmatpush1.msra.mxu0 0.0
        %794 = vmatprep.subr.mxu0 0.0
        %795 = vmatpush1.msra.mxu0 0.0
        %796 = vmatprep.subr.mxu0 0.0
        %797 = vmatpush1.msra.mxu0 0.0
        %798 = vmatprep.subr.mxu0 0.0
        %799 = vmatpush1.msra.mxu0 0.0
        %800 = vmatprep.subr.mxu0 0.0
        %801 = vmatpush1.msra.mxu0 0.0
        %802 = vmatprep.subr.mxu0 0.0
        %803 = vmatpush1.msra.mxu0 0.0
        %804 = vmatprep.subr.mxu0 0.0
        %805 = vmatpush1.msra.mxu0 0.0
        %806 = vmatprep.subr.mxu0 0.0
        %807 = vmatpush1.msra.mxu0 0.0
        %808 = vmatprep.subr.mxu0 0.0
        %809 = vmatpush1.msra.mxu0 0.0
        %810 = vmatprep.subr.mxu0 0.0
        %811 = vmatpush1.msra.mxu0 0.0
        %812 = vmatprep.subr.mxu0 0.0
        %813 = vmatpush1.msra.mxu0 0.0
        %814 = vmatprep.subr.mxu0 0.0
        %815 = vmatpush1.msra.mxu0 0.0
        %816 = vmatprep.subr.mxu0 0.0
        %817 = vmatpush1.msra.mxu0 0.0
        %818 = vmatprep.subr.mxu0 0.0
        %819 = vmatpush1.msra.mxu0 0.0
        %820 = vmatprep.subr.mxu0 0.0
        %821 = vmatpush1.msra.mxu0 0.0
        %822 = vmatprep.subr.mxu0 0.0
        %823 = vmatpush1.msra.mxu0 0.0
        %824 = vmatprep.subr.mxu0 0.0
        %825 = vmatpush1.msra.mxu0 0.0
        %826 = vmatprep.subr.mxu0 0.0
        %827 = vmatpush1.msra.mxu0 0.0
        %828 = vmatprep.mubr.f32.mxu0 0.0
        %829 = vmatmul.mubr.f32.gmra.mrb[0].mxu0 %v219
        %v830 = vpop.f32.mrb[0].mxu0
        %v831 = vadd.f32 %v215, %v830
        %v832 = vpop.f32.mrb[0].mxu0
        %833 = vdwg.mxu0
        %s834 = scalar_lea.vmem %s206, 56 [#allocation5]
        %835 = vst.msk [vmem:[%s834] sm:$0xff] %vm295, %v831
        %s836 = sand.u32 %s112, 1
        %s837 = scalar_lea.sflag [#allocation4], %s836
        %s838 = sand.u32 %s112, 1
        %s839 = smul.addr %s838, 64
        %s840 = scalar_lea.vmem [#allocation5], %s839
        // Predicated region
        $region37: #{tpu_custom_call.1} parent=31 // pred_check
          %p841 = pneg %p122
        $region38: #{tpu_custom_call.1} parent=31 // pred_check_branch
          %843 = sbr.rel (%p841) target = $region40
        $region39: #{tpu_custom_call.1} parent=31 // pred_region
          %s844 = smul.u32 8, %s25
          %s846 = ssub.s32 1024, 1024
          %847 = vsyncadd %s837, %s846
          %s848 = smul.addr %s24, 16
          %s849 = sadd.s32 %s844, %s848
          %s850 = smul.addr %s849, 128
          %s851 = scalar_lea.hbm %s3, %s850
          %s852 = sshll.u32 %s840, 4
          %s853 = int_to_ptr.vmem [resolvable:$true] %s852
          %858 = dma.vmem_to_hbm [thread:$0]  %s853, 1024, %s851, %s837, 128, 128, 8
        $region40: #{tpu_custom_call.1} parent=31 // pred_fallthru
          _
      $region32: #{tpu_custom_call.1} parent=5 // pred_fallthru
        _
      %p859 = scmp.le.s32.totalorder 2, %s15
      // Predicated region
      $region41: #{tpu_custom_call.1} parent=5 // pred_check
        %p860 = pneg %p859
      $region42: #{tpu_custom_call.1} parent=5 // pred_check_branch
        %862 = sbr.rel (%p860) target = $region44
      $region43: #{tpu_custom_call.1} parent=5 // pred_region
        %s863 = ssub.s32 %s15, 2
        // Predicated region
        $region45: #{tpu_custom_call.1} parent=43 // pred_check
          %p864 = pneg %p128
        $region46: #{tpu_custom_call.1} parent=43 // pred_check_branch
          %866 = sbr.rel (%p864) target = $region48
        $region47: #{tpu_custom_call.1} parent=43 // pred_region
          %s867 = sand.u32 %s113, 1
          %s868 = scalar_lea.sflag [#allocation4], %s867
          %s869 = sand.u32 %s113, 1
          %s870 = smul.addr %s869, 64
          %s871 = scalar_lea.vmem [#allocation5], %s870
          %872 = dma.done %s868, 1024
        $region48: #{tpu_custom_call.1} parent=43 // pred_fallthru
          _
      $region44: #{tpu_custom_call.1} parent=5 // pred_fallthru
        _
    $region6: #{tpu_custom_call.1} parent=1 // loop_footer
      %s19 = sadd.s32 1, %s15
    $region7: #{tpu_custom_call.1} parent=1 // loop_footer_branch
      %14 = sbr.rel target = $region3
    $region8: #{tpu_custom_call.1} parent=1 // loop_exit
      _
    %873 = vsyncpa [#allocation3], 1
    %s874 = scalar_lea.sflag [#allocation3], 1
    %875 = vsyncpa %s874, 1
    %876 = vsyncpa [#allocation4], 1
    %s877 = scalar_lea.sflag [#allocation4], 1
    %878 = vsyncpa %s877, 1

</llo_original>
